<compile_context>
chip_gen: v7x
topology: tpu7x:2x2x1
jax: 0.10.0
libtpu: 0.0.40
codegen_flags: <defaults>
</compile_context>

<pallas_src>
import functools

import jax
import jax.numpy as jnp
from jax.experimental import pallas as pl
from jax.experimental.pallas import tpu as pltpu

ALPHA = 0.25
GAMMA = 2.0  # exponent hard-coded as an explicit square in the kernel


def _default_num_cores():
    """2 on multi-TensorCore chips (v7x / v4 / v5p megacore), else 1."""
    try:
        kind = jax.devices()[0].device_kind.lower()
    except Exception:
        return 1
    if any(s in kind for s in ("v4", "v5p", "v7", "tpu7")):
        return 2
    return 1


def _focal_loss_kernel(logits_ref, targets_ref, out_ref, *,
                       rt, rows_total, cpc, tail_free):
    p_id = pl.program_id(0)     # "parallel" axis (TensorCore split on v7x)
    j = pl.program_id(1)        # "arbitrary" reduction axis

    @pl.when(j == 0)
    def _():
        out_ref[...] = jnp.zeros_like(out_ref)

    x = logits_ref[...]
    # targets are exactly {0, 1}: compare once, then use selects everywhere
    # (no float convert, fewer VALU mul/adds on VALU-bound v7x).
    t_nz = targets_ref[...] != 0.0

    # Fused sigmoid + numerically stable BCE-with-logits:
    # one exp, one exact reciprocal, one log1p per element (EUP work).
    e = jnp.exp(-jnp.abs(x))                    # exp(-|x|)
    inv = pl.reciprocal(1.0 + e)                # 1 / (1 + exp(-|x|))
    p = jnp.where(x >= 0.0, inv, e * inv)       # sigmoid(x), stable both signs
    ce = jnp.maximum(x, 0.0) - jnp.where(t_nz, x, 0.0) + jnp.log1p(e)

    # Focal modulation: gamma == 2 -> explicit square (no pow -> exp/log).
    m = jnp.where(t_nz, 1.0 - p, p)             # = 1 - p_t
    alpha_t = jnp.where(t_nz, ALPHA, 1.0 - ALPHA)
    loss = alpha_t * (ce * (m * m))

    def _accumulate(v):
        # Vreg-shaped accumulation: VALU-only adds into the resident (8,128)
        # block owned by this core; the single cross-lane reduce + /N happens
        # once in the wrapper.
        out_ref[...] += v.reshape(rt // 8, 8, 128).sum(axis=0)

    if tail_free:                                # static: grid divides evenly
        _accumulate(loss)
    else:
        block_row0 = (p_id * cpc + j) * rt       # un-clamped global first row
        is_full = block_row0 + rt <= rows_total

        @pl.when(is_full)
        def _():
            _accumulate(loss)

        @pl.when(jnp.logical_not(is_full))
        def _():
            # Row-level mask, only on the single partial tail block (and on
            # clamped dead grid steps) — never on the hot path.
            row = jax.lax.broadcasted_iota(jnp.int32, (rt, 128), 0)
            _accumulate(jnp.where(row < rows_total - block_row0, loss, 0.0))


def focal_loss(logits, targets, *, row_tile=4096, num_cores=None):
    assert logits.shape == targets.shape
    n_total = logits.size
    assert n_total > 0
    if num_cores is None:
        num_cores = _default_num_cores()

    x_flat = logits.reshape(-1).astype(jnp.float32)    # no-op for f32 inputs
    t_flat = targets.reshape(-1).astype(jnp.float32)   # no-op for f32 inputs

    # Present a lane-dense (rows, 128) view.  This is a free bitcast whenever
    # n_total is a multiple of 128 with at least 8 rows; otherwise fall back to
    # a sentinel pad (x=-1e4, t=0 -> loss contribution exactly 0), which costs
    # one extra HBM pass but never needs an in-kernel element mask.
    padded = max(pl.cdiv(n_total, 128) * 128, 8 * 128)
    if padded != n_total:
        # TODO(synk): odd sizes pay one pad pass; a fully pad-free path would
        # need 1-D blocks or a separate tiny JAX tail sum.
        x_flat = jnp.pad(x_flat, (0, padded - n_total), constant_values=-1e4)
        t_flat = jnp.pad(t_flat, (0, padded - n_total), constant_values=0.0)
    rows = padded // 128
    x2 = x_flat.reshape(rows, 128)
    t2 = t_flat.reshape(rows, 128)

    # Row tile: multiple of 8, never larger than the array, ~rows/num_cores.
    per_core = pl.cdiv(pl.cdiv(rows, num_cores), 8) * 8
    rt = max(8, min(row_tile, (rows // 8) * 8, per_core))
    total_blocks = pl.cdiv(rows, rt)
    cpc = pl.cdiv(total_blocks, num_cores)            # grid steps per core
    tail_free = (rows % rt == 0) and (total_blocks % num_cores == 0)

    def idx_map(p, j):
        b = p * cpc + j
        if num_cores * cpc > total_blocks:            # static: clamp dead steps
            b = jnp.minimum(b, total_blocks - 1)      # (kernel zeroes them out)
        return (b, 0)

    kernel = functools.partial(
        _focal_loss_kernel, rt=rt, rows_total=rows, cpc=cpc,
        tail_free=tail_free)

    partials = pl.pallas_call(
        kernel,
        out_shape=jax.ShapeDtypeStruct((num_cores * 8, 128), jnp.float32),
        grid_spec=pltpu.PrefetchScalarGridSpec(
            num_scalar_prefetch=0,
            grid=(num_cores, cpc),
            in_specs=[
                pl.BlockSpec((rt, 128), idx_map),
                pl.BlockSpec((rt, 128), idx_map),
            ],
            out_specs=pl.BlockSpec((8, 128), lambda p, j: (p, 0)),
        ),
        compiler_params=pltpu.CompilerParams(
            dimension_semantics=("parallel", "arbitrary"),
        ),
    )(x2, t2)

    # One-time cross-lane reduction of the per-core partial sums + mean.
    return jnp.sum(partials) / jnp.float32(n_total)


def _focal_loss_ref(logits, targets, alpha=ALPHA, gamma=GAMMA):
    x = logits.astype(jnp.float32)
    t = targets.astype(jnp.float32)
    p = jax.nn.sigmoid(x)
    ce = jnp.maximum(x, 0.0) - x * t + jnp.log1p(jnp.exp(-jnp.abs(x)))
    p_t = p * t + (1.0 - p) * (1.0 - t)
    loss = ce * (1.0 - p_t) ** gamma
    alpha_t = alpha * t + (1.0 - alpha) * (1.0 - t)
    return jnp.mean(alpha_t * loss)


if __name__ == "__main__":
    key = jax.random.PRNGKey(0)
    k1, k2 = jax.random.split(key)
    # NCHW-style logits (dense per-pixel multi-label), binary targets.
    shape = (2, 4, 16, 16)
    logits = jax.random.normal(k1, shape, dtype=jnp.float32) * 2.0
    targets = (jax.random.uniform(k2, shape) > 0.5).astype(jnp.float32)

    out = focal_loss(logits, targets)
    out = jax.block_until_ready(out)

    ref = _focal_loss_ref(logits, targets)
    assert jnp.allclose(out, ref, rtol=2e-5, atol=1e-6), (out, ref)
    print("KERNEL_OK")
</pallas_src>

<mosaic_0001>
module attributes {stable_mosaic.version = 11 : i64} {
  func.func @_focal_loss_kernel(%arg0: i32, %arg1: i32, %arg2: memref<16x128xf32, #tpu.memory_space<vmem>>, %arg3: memref<16x128xf32, #tpu.memory_space<vmem>>, %arg4: memref<8x128xf32, #tpu.memory_space<vmem>>) attributes {dimension_semantics = [#tpu.dimension_semantics<parallel>, #tpu.dimension_semantics<arbitrary>], iteration_bounds = array<i64: 1, 1>, scalar_prefetch = 0 : i64, scratch_operands = 0 : i64, tpu.core_type = #tpu.core_type<tc>, window_params = [{transform_indices = @transform_0, window_bounds = array<i64: 16, 128>}, {transform_indices = @transform_1, window_bounds = array<i64: 16, 128>}, {transform_indices = @transform_2, window_bounds = array<i64: 8, 128>}]} {
    %c0_i32 = arith.constant 0 : i32
    %0 = arith.cmpi eq, %arg1, %c0_i32 : i32
    %1 = arith.extui %0 : i1 to i32
    %c0_i32_0 = arith.constant 0 : i32
    %2 = arith.cmpi ne, %1, %c0_i32_0 : i32
    scf.if %2 {
      %cst_17 = arith.constant 0.000000e+00 : f32
      %39 = vector.broadcast %cst_17 : f32 to vector<8x128xf32>
      %c0_18 = arith.constant 0 : index
      %c0_19 = arith.constant 0 : index
      %40 = vector.load %arg4[%c0_18, %c0_19] : memref<8x128xf32, #tpu.memory_space<vmem>>, vector<8x128xf32>
      tpu.vector_store %arg4[%c0_18, %c0_19], %39 {strides = array<i32>} : memref<8x128xf32, #tpu.memory_space<vmem>>, vector<8x128xf32>,
    } else {
    }
    %c0 = arith.constant 0 : index
    %c0_1 = arith.constant 0 : index
    %3 = vector.load %arg2[%c0, %c0_1] : memref<16x128xf32, #tpu.memory_space<vmem>>, vector<16x128xf32>
    %c0_2 = arith.constant 0 : index
    %c0_3 = arith.constant 0 : index
    %4 = vector.load %arg3[%c0_2, %c0_3] : memref<16x128xf32, #tpu.memory_space<vmem>>, vector<16x128xf32>
    %cst = arith.constant 0.000000e+00 : f32
    %5 = vector.broadcast %cst : f32 to vector<16x128xf32>
    %6 = arith.cmpf one, %4, %5 : vector<16x128xf32>
    %7 = math.absf %3 : vector<16x128xf32>
    %cst_4 = arith.constant 0.000000e+00 : f32
    %8 = vector.broadcast %cst_4 : f32 to vector<16x128xf32>
    %9 = arith.subf %8, %7 : vector<16x128xf32>
    %10 = math.exp %9 : vector<16x128xf32>
    %cst_5 = arith.constant 1.000000e+00 : f32
    %11 = vector.broadcast %cst_5 : f32 to vector<16x128xf32>
    %12 = arith.addf %11, %10 : vector<16x128xf32>
    %13 = tpu.reciprocal %12 : vector<16x128xf32> -> vector<16x128xf32>
    %cst_6 = arith.constant 0.000000e+00 : f32
    %14 = vector.broadcast %cst_6 : f32 to vector<16x128xf32>
    %15 = arith.cmpf oge, %3, %14 : vector<16x128xf32>
    %16 = arith.mulf %10, %13 : vector<16x128xf32>
    %17 = arith.select %15, %13, %16 : vector<16x128xi1>, vector<16x128xf32>
    %cst_7 = arith.constant 0.000000e+00 : f32
    %18 = vector.broadcast %cst_7 : f32 to vector<16x128xf32>
    %19 = arith.maximumf %3, %18 : vector<16x128xf32>
    %cst_8 = arith.constant 0.000000e+00 : f32
    %20 = vector.broadcast %cst_8 : f32 to vector<16x128xf32>
    %21 = arith.select %6, %3, %20 : vector<16x128xi1>, vector<16x128xf32>
    %22 = arith.subf %19, %21 : vector<16x128xf32>
    %23 = math.log1p %10 : vector<16x128xf32>
    %24 = arith.addf %22, %23 : vector<16x128xf32>
    %cst_9 = arith.constant 1.000000e+00 : f32
    %25 = vector.broadcast %cst_9 : f32 to vector<16x128xf32>
    %26 = arith.subf %25, %17 : vector<16x128xf32>
    %27 = arith.select %6, %26, %17 : vector<16x128xi1>, vector<16x128xf32>
    %cst_10 = arith.constant 2.500000e-01 : f32
    %cst_11 = arith.constant 7.500000e-01 : f32
    %28 = vector.broadcast %cst_10 : f32 to vector<16x128xf32>
    %29 = vector.broadcast %cst_11 : f32 to vector<16x128xf32>
    %30 = arith.select %6, %28, %29 : vector<16x128xi1>, vector<16x128xf32>
    %31 = arith.mulf %27, %27 : vector<16x128xf32>
    %32 = arith.mulf %24, %31 : vector<16x128xf32>
    %33 = arith.mulf %30, %32 : vector<16x128xf32>
    %c0_12 = arith.constant 0 : index
    %c0_13 = arith.constant 0 : index
    %34 = vector.load %arg4[%c0_12, %c0_13] : memref<8x128xf32, #tpu.memory_space<vmem>>, vector<8x128xf32>
    %35 = vector.shape_cast %33 : vector<16x128xf32> to vector<2x8x128xf32>
    %cst_14 = arith.constant dense<0.000000e+00> : vector<8x128xf32>
    %36 = vector.multi_reduction <add>, %35, %cst_14 [0] : vector<2x8x128xf32> to vector<8x128xf32>
    %37 = arith.addf %34, %36 : vector<8x128xf32>
    %c0_15 = arith.constant 0 : index
    %c0_16 = arith.constant 0 : index
    %38 = vector.load %arg4[%c0_15, %c0_16] : memref<8x128xf32, #tpu.memory_space<vmem>>, vector<8x128xf32>
    tpu.vector_store %arg4[%c0_15, %c0_16], %37 {strides = array<i32>} : memref<8x128xf32, #tpu.memory_space<vmem>>, vector<8x128xf32>,
    return
  }
  func.func @transform_0(%arg0: i32, %arg1: i32) -> (i32, i32) {
    %c1_i32 = arith.constant 1 : i32
    %0 = arith.muli %arg0, %c1_i32 : i32
    %1 = arith.addi %0, %arg1 : i32
    %c0_i32 = arith.constant 0 : i32
    %c0_i32_0 = arith.constant 0 : i32
    return %1, %c0_i32 : i32, i32
  }
  func.func @transform_1(%arg0: i32, %arg1: i32) -> (i32, i32) {
    %c1_i32 = arith.constant 1 : i32
    %0 = arith.muli %arg0, %c1_i32 : i32
    %1 = arith.addi %0, %arg1 : i32
    %c0_i32 = arith.constant 0 : i32
    %c0_i32_0 = arith.constant 0 : i32
    return %1, %c0_i32 : i32, i32
  }
  func.func @transform_2(%arg0: i32, %arg1: i32) -> (i32, i32) {
    %c0_i32 = arith.constant 0 : i32
    %c0_i32_0 = arith.constant 0 : i32
    return %arg0, %c0_i32 : i32, i32
  }
}

</mosaic_0001>

<llo_original>
// kernel: tpu_custom_call.1
$region0: #{tpu_custom_call.1}
  #allocation0 [shape = 'u32[]', space=smem, size = 0x4, offset = 0x4, fixed_abs, tag = 'smem constant byte address 0x4 - core index']
  #allocation1 [shape = 'u32[144,128]{1,0:T(1,128)}', space=vmem, size = 0x12000, scoped, tag = 'internal scratch']
  %s0 = inlined_call_operand.hbm [shape: f32[16,128], index: 0, kind: input, shape index: {}]
  %s1 = inlined_call_operand.hbm [shape: f32[16,128], index: 1, kind: input, shape index: {}]
  %s2 = inlined_call_operand.hbm [shape: f32[8,128], index: 2, kind: output, shape index: {}]
  %s3 = sld [smem:[#allocation0]]
  $region30: #{tpu_custom_call.1} parent=0
    _
  %s5 = ssub.s32 1, %s3
  %s6 = scalar_select 0, %s5, %s3
  $region1: #{tpu_custom_call.1} parent=0
    #allocation2 [shape = 'u8[8192]{0}', space=vmem, size = 0x2000, scoped, tag = 'input window, operand 0, single buffered']
    #allocation3 [shape = 's32[1]{0}', space=sflag, size = 0x4, scoped, tag = 'scoped memory for tpu_custom_call.1']
    #allocation4 [shape = 's32[1]{0}', space=sflag, size = 0x4, scoped, tag = 'scoped memory for tpu_custom_call.1']
    #allocation5 [shape = 'u8[8192]{0}', space=vmem, size = 0x2000, scoped, tag = 'input window, operand 1, single buffered']
    #allocation6 [shape = 's32[1]{0}', space=sflag, size = 0x4, scoped, tag = 'scoped memory for tpu_custom_call.1']
    #allocation7 [shape = 'u8[4096]{0}', space=vmem, size = 0x1000, scoped, tag = 'output window, operand 0, single buffered']
    %7 = vsyncpa [#allocation3], 0
    %8 = vsyncpa [#allocation6], 0
    %9 = vsyncpa [#allocation4], 0
    // Predicated region
    $region2: #{tpu_custom_call.1} parent=1 // pred_check
      _
    $region3: #{tpu_custom_call.1} parent=1 // pred_check_branch
      %11 = sbr.rel (0) target = $region5
    $region4: #{tpu_custom_call.1} parent=1 // pred_region
      %s12 = sadd.s32 0, 0
      %s13 = smul.u32 2, %s12
      %s15 = ssub.s32 256, 256
      %16 = vsyncadd [#allocation3], %s15
      %s17 = smul.addr %s13, 128
      %s18 = scalar_lea.hbm %s0, %s17
      %s19 = sshll.u32 [#allocation2], 4
      %s20 = int_to_ptr.vmem [resolvable:$true] %s19
      %25 = dma.hbm_to_vmem [thread:$0]  %s18, 256, %s20, [#allocation3], 128, 128, 8
    $region5: #{tpu_custom_call.1} parent=1 // pred_fallthru
      _
    // Predicated region
    $region6: #{tpu_custom_call.1} parent=1 // pred_check
      _
    $region7: #{tpu_custom_call.1} parent=1 // pred_check_branch
      %27 = sbr.rel (0) target = $region9
    $region8: #{tpu_custom_call.1} parent=1 // pred_region
      %s28 = sadd.s32 0, 0
      %s29 = smul.u32 2, %s28
      %s31 = ssub.s32 256, 256
      %32 = vsyncadd [#allocation6], %s31
      %s33 = smul.addr %s29, 128
      %s34 = scalar_lea.hbm %s1, %s33
      %s35 = sshll.u32 [#allocation5], 4
      %s36 = int_to_ptr.vmem [resolvable:$true] %s35
      %41 = dma.hbm_to_vmem [thread:$0]  %s34, 256, %s36, [#allocation6], 128, 128, 8
    $region9: #{tpu_custom_call.1} parent=1 // pred_fallthru
      _
    // Predicated region
    $region10: #{tpu_custom_call.1} parent=1 // pred_check
      _
    $region11: #{tpu_custom_call.1} parent=1 // pred_check_branch
      %43 = sbr.rel (0) target = $region13
    $region12: #{tpu_custom_call.1} parent=1 // pred_region
      %44 = dma.done [#allocation3], 256
    $region13: #{tpu_custom_call.1} parent=1 // pred_fallthru
      _
    // Predicated region
    $region14: #{tpu_custom_call.1} parent=1 // pred_check
      _
    $region15: #{tpu_custom_call.1} parent=1 // pred_check_branch
      %46 = sbr.rel (0) target = $region17
    $region16: #{tpu_custom_call.1} parent=1 // pred_region
      %47 = dma.done [#allocation6], 256
    $region17: #{tpu_custom_call.1} parent=1 // pred_fallthru
      _
    %s48 = sadd.s32 0, 0
    %s49 = smul.u32 2, %s48
    %s50 = sadd.s32 0, 0
    %s51 = smul.u32 2, %s50
    %p52 = scmp.eq.s32.totalorder 0, 0
    // Predicated region
    $region18: #{tpu_custom_call.1} parent=1 // pred_check
      %p53 = pneg %p52
    $region19: #{tpu_custom_call.1} parent=1 // pred_check_branch
      %55 = sbr.rel (%p53) target = $region21
    $region20: #{tpu_custom_call.1} parent=1 // pred_region
      %56 = vst [vmem:[#allocation7] sm:$0xff] 0.0
    $region21: #{tpu_custom_call.1} parent=1 // pred_fallthru
      _
    %v57 = vld [vmem:[#allocation2] sm:$0xff]
    %v58 = vld [vmem:[#allocation2 + $0x8] sm:$0xff]
    %v59 = vld [vmem:[#allocation5] sm:$0xff]
    %v60 = vld [vmem:[#allocation5 + $0x8] sm:$0xff]
    %vm61 = vcmp.ne.f32.partialorder %v59, 0.0
    %vm62 = vcmp.ne.f32.partialorder %v60, 0.0
    %v63 = vand.u32 2147483647, %v57
    %v64 = vand.u32 2147483647, %v58
    %v65 = vsub.f32 0.0, %v63
    %v66 = vsub.f32 0.0, %v64
    %v67 = vmul.f32 %v65, 1.442695
    %v68 = vpow.pop %v67
    %v69 = vmul.f32 %v66, 1.442695
    %v70 = vpow.pop %v69
    %v71 = vadd.f32 %v68, 1.0
    %v72 = vadd.f32 %v70, 1.0
    %v73 = vrcp.pop %v71
    %v74 = vrcp.pop %v72
    %vm75 = vcmp.ge.f32.partialorder %v57, 0.0
    %vm76 = vcmp.ge.f32.partialorder %v58, 0.0
    %v77 = vmul.f32 %v68, %v73
    %v78 = vmul.f32 %v70, %v74
    %v79 = vsel %vm75, %v73, %v77
    %v80 = vsel %vm76, %v74, %v78
    %v81 = vmax.f32 %v57, 0.0
    %v82 = vmax.f32 %v58, 0.0
    %v83 = vsel %vm61, %v57, 0.0
    %v84 = vsel %vm62, %v58, 0.0
    %v85 = vsub.f32 %v81, %v83
    %v86 = vsub.f32 %v82, %v84
    %v87 = vadd.f32 %v68, 1.0
    %v88 = vlog2.pop %v87
    %v89 = vmul.f32 %v88, 0.6931472
    %v90 = vmul.f32 -0.5, %v68
    %v91 = vadd.f32 %v90, 1.0
    %v92 = vmul.f32 %v91, %v68
    %v93 = vand.u32 2147483647, %v68
    %vm94 = vcmp.lt.f32.partialorder %v93, 0.0004427343
    %v95 = vsel %vm94, %v92, %v89
    %v96 = vadd.f32 %v70, 1.0
    %v97 = vlog2.pop %v96
    %v98 = vmul.f32 %v97, 0.6931472
    %v99 = vmul.f32 -0.5, %v70
    %v100 = vadd.f32 %v99, 1.0
    %v101 = vmul.f32 %v100, %v70
    %v102 = vand.u32 2147483647, %v70
    %vm103 = vcmp.lt.f32.partialorder %v102, 0.0004427343
    %v104 = vsel %vm103, %v101, %v98
    %v105 = vadd.f32 %v85, %v95
    %v106 = vadd.f32 %v86, %v104
    %v107 = vsub.f32 1.0, %v79
    %v108 = vsub.f32 1.0, %v80
    %v109 = vsel %vm61, %v107, %v79
    %v110 = vsel %vm62, %v108, %v80
    %v111 = vsel %vm61, 0.25, 0.75
    %v112 = vsel %vm62, 0.25, 0.75
    %v113 = vmul.f32 %v109, %v109
    %v114 = vmul.f32 %v110, %v110
    %v115 = vmul.f32 %v105, %v113
    %v116 = vmul.f32 %v106, %v114
    %v117 = vmul.f32 %v111, %v115
    %v118 = vmul.f32 %v112, %v116
    %v119 = vld [vmem:[#allocation7] sm:$0xff]
    %v120 = vadd.f32 %v117, %v118
    %v121 = vadd.f32 %v119, %v120
    %122 = vst [vmem:[#allocation7] sm:$0xff] %v121
    // Predicated region
    $region22: #{tpu_custom_call.1} parent=1 // pred_check
      _
    $region23: #{tpu_custom_call.1} parent=1 // pred_check_branch
      %124 = sbr.rel (0) target = $region25
    $region24: #{tpu_custom_call.1} parent=1 // pred_region
      %s126 = ssub.s32 128, 128
      %127 = vsyncadd [#allocation4], %s126
      %s129 = sshll.u32 [#allocation7], 4
      %s130 = int_to_ptr.vmem [resolvable:$true] %s129
      %132 = dma.vmem_to_hbm [thread:$0]  %s130, 128, %s2, [#allocation4]
    $region25: #{tpu_custom_call.1} parent=1 // pred_fallthru
      _
    // Predicated region
    $region26: #{tpu_custom_call.1} parent=1 // pred_check
      _
    $region27: #{tpu_custom_call.1} parent=1 // pred_check_branch
      %134 = sbr.rel (0) target = $region29
    $region28: #{tpu_custom_call.1} parent=1 // pred_region
      %135 = dma.done [#allocation4], 128
    $region29: #{tpu_custom_call.1} parent=1 // pred_fallthru
      _
    %136 = vsyncpa [#allocation3], 1
    %137 = vsyncpa [#allocation6], 1
    %138 = vsyncpa [#allocation4], 1

</llo_original>
